<compile_context>
chip_gen: v7x
topology: tpu7x:2x2x1
jax: 0.10.0
libtpu: 0.0.40
codegen_flags: <defaults>
</compile_context>

<pallas_src>
import jax
import jax.numpy as jnp
from jax.experimental import pallas as pl
from jax.experimental.pallas import tpu as pltpu

H_PAD = 256    # head hidden dim 200 padded to a lane multiple
OUT_PAD = 128  # lane-dense output width; real output lives in column 0


def _round_up(n, m):
    return (n + m - 1) // m * m


def res18_head_kernel(x_ref, w1_ref, b1_ref, w2_ref, b2_ref, o_ref, acc_ref):
    """Fused (folded backbone + Linear -> ReLU -> Linear) head, K-tiled."""
    k = pl.program_id(1)

    @pl.when(k == 0)
    def _():
        acc_ref[...] = jnp.zeros_like(acc_ref)

    # Accumulate x_tile @ Wfold_tile on the MXU (bf16 inputs, f32 accumulate).
    acc_ref[...] += jnp.dot(x_ref[...], w1_ref[...],
                            preferred_element_type=jnp.float32)

    @pl.when(k == pl.num_programs(1) - 1)
    def _():
        # Bias add + ReLU in f32 (padded lanes stay exactly zero).
        h = jnp.maximum(acc_ref[...] + b1_ref[...], 0.0)
        # Final 256 -> 128 projection (only column 0 is non-zero) keeps the
        # store lane-dense instead of an N=1 matmul + masked 1-lane store.
        out = jnp.dot(h, w2_ref[...],
                      preferred_element_type=jnp.float32) + b2_ref[...]
        o_ref[...] = out.astype(o_ref.dtype)


def res18_forward(x, kernel_params):
    """x: (B, C, H, W) float32. Returns (B, 1) float32 (the `gene1` output)."""
    w1f, b1f, w2p, b2p = kernel_params
    B = x.shape[0]
    K_pad = w1f.shape[0]

    x_flat = x.reshape(B, -1)
    in_features = x_flat.shape[1]
    assert in_features <= K_pad

    # Batch padded to the f32 sublane tile (8) for tiny batches, 128 otherwise.
    b_tile = 8 if B <= 8 else 128
    B_pad = _round_up(B, b_tile)
    # K tile: biggest of (512, 256, 128) dividing the padded feature dim.
    k_tile = next(t for t in (512, 256, 128) if K_pad % t == 0)
    grid = (B_pad // b_tile, K_pad // k_tile)

    # Glue: NCHW -> (B_pad, K_pad) zero-padded, bf16 for HBM/MXU traffic.
    x_pad = jnp.zeros((B_pad, K_pad), jnp.float32)
    x_pad = x_pad.at[:B, :in_features].set(x_flat)
    x_pad = x_pad.astype(jnp.bfloat16)

    bytes_accessed = (x_pad.size * 2 + w1f.size * 2
                      + (b1f.size + w2p.size + b2p.size) * 4
                      + B_pad * OUT_PAD * 4)
    flops = 2 * B_pad * K_pad * H_PAD + 2 * B_pad * H_PAD * OUT_PAD

    out = pl.pallas_call(
        res18_head_kernel,
        out_shape=jax.ShapeDtypeStruct((B_pad, OUT_PAD), jnp.float32),
        grid_spec=pltpu.PrefetchScalarGridSpec(
            num_scalar_prefetch=0,
            grid=grid,
            in_specs=[
                pl.BlockSpec((b_tile, k_tile), lambda i, k: (i, k)),   # x tile
                pl.BlockSpec((k_tile, H_PAD), lambda i, k: (k, 0)),    # folded W (bf16)
                pl.BlockSpec((1, H_PAD), lambda i, k: (0, 0)),         # folded bias (f32)
                pl.BlockSpec((H_PAD, OUT_PAD), lambda i, k: (0, 0)),   # final proj (f32)
                pl.BlockSpec((1, OUT_PAD), lambda i, k: (0, 0)),       # final bias (f32)
            ],
            out_specs=pl.BlockSpec((b_tile, OUT_PAD), lambda i, k: (i, 0)),
            scratch_shapes=[pltpu.VMEM((b_tile, H_PAD), jnp.float32)],
        ),
        compiler_params=pltpu.CompilerParams(
            dimension_semantics=("parallel", "arbitrary"),
            vmem_limit_bytes=32 * 1024 * 1024,   # fits v7x's 64 MiB physical VMEM
        ),
        cost_estimate=pl.CostEstimate(
            flops=flops, transcendentals=0, bytes_accessed=bytes_accessed),
    )(x_pad, w1f, b1f, w2p, b2p)

    return out[:B, :1]


def init_params(key, in_features):
    """Original (unfolded) parameters, PyTorch nn.Linear-style uniform init.

    Weights are stored transposed relative to nn.Linear, i.e. (fan_in, fan_out),
    so y = x @ W + b matches y = x @ weight.T + bias in PyTorch.
    """
    kb, k1, k2 = jax.random.split(key, 3)

    def linear(k, fan_in, fan_out):
        kw, kbias = jax.random.split(k)
        bound = 1.0 / jnp.sqrt(jnp.float32(fan_in))
        w = jax.random.uniform(kw, (fan_in, fan_out), jnp.float32, -bound, bound)
        b = jax.random.uniform(kbias, (1, fan_out), jnp.float32, -bound, bound)
        return w, b

    wb, bb = linear(kb, in_features, 1000)   # synthetic stand-in backbone -> 1000 feats
    w1, b1 = linear(k1, 1000, 200)           # nn.Linear(1000, 200)
    w2, b2 = linear(k2, 200, 1)              # nn.Linear(200, 1)
    return wb, bb, w1, b1, w2, b2


def prepare_kernel_params(params, in_features):
    """Fold the linear stand-in backbone into the first head linear, zero-pad to
    TPU lane multiples and cast the big weight to bf16."""
    wb, bb, w1, b1, w2, b2 = params
    hi = jax.lax.Precision.HIGHEST
    w_fold = jnp.dot(wb, w1, precision=hi)        # (in_features, 200)
    b_fold = jnp.dot(bb, w1, precision=hi) + b1   # (1, 200)

    K_pad = _round_up(in_features, 128)
    w1f = jnp.zeros((K_pad, H_PAD), jnp.float32).at[:in_features, :200].set(w_fold)
    b1f = jnp.zeros((1, H_PAD), jnp.float32).at[:, :200].set(b_fold)
    w2p = jnp.zeros((H_PAD, OUT_PAD), jnp.float32).at[:200, :1].set(w2)
    b2p = jnp.zeros((1, OUT_PAD), jnp.float32).at[:, :1].set(b2)
    return w1f.astype(jnp.bfloat16), b1f, w2p, b2p


if __name__ == "__main__":
    key = jax.random.PRNGKey(0)
    kx, kp = jax.random.split(key)

    # Small NCHW image batch; C*H*W = 1024 is already a lane multiple.
    B, C, H, W = 2, 4, 16, 16
    x = jax.random.normal(kx, (B, C, H, W), jnp.float32)
    in_features = C * H * W

    params = init_params(kp, in_features)
    kparams = prepare_kernel_params(params, in_features)

    out = res18_forward(x, kparams)
    out = jax.block_until_ready(out)

    # Pure-JAX unfolded f32 reference (original module semantics:
    # backbone -> Linear(1000,200) -> ReLU -> Linear(200,1)).
    wb, bb, w1, b1, w2, b2 = params
    hi = jax.lax.Precision.HIGHEST
    feats = jnp.dot(x.reshape(B, -1), wb, precision=hi) + bb
    h = jnp.maximum(jnp.dot(feats, w1, precision=hi) + b1, 0.0)
    ref = jnp.dot(h, w2, precision=hi) + b2

    assert out.shape == (B, 1)
    # Tolerance accounts for bf16 weight/input quantization in the kernel.
    assert jnp.allclose(out, ref, atol=1e-2, rtol=1e-2), (out, ref)

    print("KERNEL_OK")
</pallas_src>

<mosaic_0001>
module attributes {stable_mosaic.version = 11 : i64} {
  func.func @res18_head_kernel(%arg0: i32, %arg1: i32, %arg2: memref<8x512xbf16, #tpu.memory_space<vmem>>, %arg3: memref<512x256xbf16, #tpu.memory_space<vmem>>, %arg4: memref<1x256xf32, #tpu.memory_space<vmem>>, %arg5: memref<256x128xf32, #tpu.memory_space<vmem>>, %arg6: memref<1x128xf32, #tpu.memory_space<vmem>>, %arg7: memref<8x128xf32, #tpu.memory_space<vmem>>, %arg8: memref<8x256xf32, #tpu.memory_space<vmem>>) attributes {dimension_semantics = [#tpu.dimension_semantics<parallel>, #tpu.dimension_semantics<arbitrary>], iteration_bounds = array<i64: 1, 2>, scalar_prefetch = 0 : i64, scratch_operands = 1 : i64, tpu.core_type = #tpu.core_type<tc>, window_params = [{transform_indices = @transform_0, window_bounds = array<i64: 8, 512>}, {transform_indices = @transform_1, window_bounds = array<i64: 512, 256>}, {pipeline_mode = #tpu.pipeline_mode<synchronous>, transform_indices = @transform_2, window_bounds = array<i64: 1, 256>}, {pipeline_mode = #tpu.pipeline_mode<synchronous>, transform_indices = @transform_3, window_bounds = array<i64: 256, 128>}, {pipeline_mode = #tpu.pipeline_mode<synchronous>, transform_indices = @transform_4, window_bounds = array<i64: 1, 128>}, {transform_indices = @transform_5, window_bounds = array<i64: 8, 128>}]} {
    %c0_i32 = arith.constant 0 : i32
    %0 = arith.cmpi eq, %arg1, %c0_i32 : i32
    %1 = arith.extui %0 : i1 to i32
    %c0_i32_0 = arith.constant 0 : i32
    %2 = arith.cmpi ne, %1, %c0_i32_0 : i32
    scf.if %2 {
      %cst_9 = arith.constant 0.000000e+00 : f32
      %12 = vector.broadcast %cst_9 : f32 to vector<8x256xf32>
      %c0_10 = arith.constant 0 : index
      %c0_11 = arith.constant 0 : index
      %13 = vector.load %arg8[%c0_10, %c0_11] : memref<8x256xf32, #tpu.memory_space<vmem>>, vector<8x256xf32>
      tpu.vector_store %arg8[%c0_10, %c0_11], %12 {strides = array<i32>} : memref<8x256xf32, #tpu.memory_space<vmem>>, vector<8x256xf32>,
    } else {
    }
    %c0 = arith.constant 0 : index
    %c0_1 = arith.constant 0 : index
    %3 = vector.load %arg8[%c0, %c0_1] : memref<8x256xf32, #tpu.memory_space<vmem>>, vector<8x256xf32>
    %c0_2 = arith.constant 0 : index
    %c0_3 = arith.constant 0 : index
    %4 = vector.load %arg2[%c0_2, %c0_3] : memref<8x512xbf16, #tpu.memory_space<vmem>>, vector<8x512xbf16>
    %c0_4 = arith.constant 0 : index
    %c0_5 = arith.constant 0 : index
    %5 = vector.load %arg3[%c0_4, %c0_5] : memref<512x256xbf16, #tpu.memory_space<vmem>>, vector<512x256xbf16>
    %cst = arith.constant dense<0.000000e+00> : vector<8x256xf32>
    %6 = tpu.matmul %4, %5, %cst {dimension_numbers = #tpu.dot_dimension_numbers<[1], [0], [0], [1], [0, 0, 1, 1], [], []>} : vector<8x512xbf16>, vector<512x256xbf16>, vector<8x256xf32> -> vector<8x256xf32>
    %7 = arith.addf %3, %6 : vector<8x256xf32>
    %c0_6 = arith.constant 0 : index
    %c0_7 = arith.constant 0 : index
    %8 = vector.load %arg8[%c0_6, %c0_7] : memref<8x256xf32, #tpu.memory_space<vmem>>, vector<8x256xf32>
    tpu.vector_store %arg8[%c0_6, %c0_7], %7 {strides = array<i32>} : memref<8x256xf32, #tpu.memory_space<vmem>>, vector<8x256xf32>,
    %c1_i32 = arith.constant 1 : i32
    %9 = arith.cmpi eq, %arg1, %c1_i32 : i32
    %10 = arith.extui %9 : i1 to i32
    %c0_i32_8 = arith.constant 0 : i32
    %11 = arith.cmpi ne, %10, %c0_i32_8 : i32
    scf.if %11 {
      %c0_9 = arith.constant 0 : index
      %c0_10 = arith.constant 0 : index
      %12 = vector.load %arg8[%c0_9, %c0_10] : memref<8x256xf32, #tpu.memory_space<vmem>>, vector<8x256xf32>
      %c0_11 = arith.constant 0 : index
      %c0_12 = arith.constant 0 : index
      %13 = vector.load %arg4[%c0_11, %c0_12] : memref<1x256xf32, #tpu.memory_space<vmem>>, vector<1x256xf32>
      %14 = vector.broadcast %13 : vector<1x256xf32> to vector<8x256xf32>
      %15 = arith.addf %12, %14 : vector<8x256xf32>
      %cst_13 = arith.constant 0.000000e+00 : f32
      %16 = vector.broadcast %cst_13 : f32 to vector<8x256xf32>
      %17 = arith.maximumf %15, %16 : vector<8x256xf32>
      %c0_14 = arith.constant 0 : index
      %c0_15 = arith.constant 0 : index
      %18 = vector.load %arg5[%c0_14, %c0_15] : memref<256x128xf32, #tpu.memory_space<vmem>>, vector<256x128xf32>
      %cst_16 = arith.constant dense<0.000000e+00> : vector<8x128xf32>
      %19 = tpu.matmul %17, %18, %cst_16 {dimension_numbers = #tpu.dot_dimension_numbers<[1], [0], [0], [1], [0, 0, 1, 1], [], []>} : vector<8x256xf32>, vector<256x128xf32>, vector<8x128xf32> -> vector<8x128xf32>
      %c0_17 = arith.constant 0 : index
      %c0_18 = arith.constant 0 : index
      %20 = vector.load %arg6[%c0_17, %c0_18] : memref<1x128xf32, #tpu.memory_space<vmem>>, vector<1x128xf32>
      %21 = vector.broadcast %20 : vector<1x128xf32> to vector<8x128xf32>
      %22 = arith.addf %19, %21 : vector<8x128xf32>
      %c0_19 = arith.constant 0 : index
      %c0_20 = arith.constant 0 : index
      %23 = vector.load %arg7[%c0_19, %c0_20] : memref<8x128xf32, #tpu.memory_space<vmem>>, vector<8x128xf32>
      tpu.vector_store %arg7[%c0_19, %c0_20], %22 {strides = array<i32>} : memref<8x128xf32, #tpu.memory_space<vmem>>, vector<8x128xf32>,
    } else {
    }
    return
  }
  func.func @transform_0(%arg0: i32, %arg1: i32) -> (i32, i32) {
    %c0_i32 = arith.constant 0 : i32
    return %arg0, %arg1 : i32, i32
  }
  func.func @transform_1(%arg0: i32, %arg1: i32) -> (i32, i32) {
    %c0_i32 = arith.constant 0 : i32
    %c0_i32_0 = arith.constant 0 : i32
    return %arg1, %c0_i32 : i32, i32
  }
  func.func @transform_2(%arg0: i32, %arg1: i32) -> (i32, i32) {
    %c0_i32 = arith.constant 0 : i32
    %c0_i32_0 = arith.constant 0 : i32
    %c0_i32_1 = arith.constant 0 : i32
    return %c0_i32, %c0_i32_0 : i32, i32
  }
  func.func @transform_3(%arg0: i32, %arg1: i32) -> (i32, i32) {
    %c0_i32 = arith.constant 0 : i32
    %c0_i32_0 = arith.constant 0 : i32
    %c0_i32_1 = arith.constant 0 : i32
    return %c0_i32, %c0_i32_0 : i32, i32
  }
  func.func @transform_4(%arg0: i32, %arg1: i32) -> (i32, i32) {
    %c0_i32 = arith.constant 0 : i32
    %c0_i32_0 = arith.constant 0 : i32
    %c0_i32_1 = arith.constant 0 : i32
    return %c0_i32, %c0_i32_0 : i32, i32
  }
  func.func @transform_5(%arg0: i32, %arg1: i32) -> (i32, i32) {
    %c0_i32 = arith.constant 0 : i32
    %c0_i32_0 = arith.constant 0 : i32
    return %arg0, %c0_i32 : i32, i32
  }
}

</mosaic_0001>

<llo_original>
// kernel: tpu_custom_call.1
$region0: #{tpu_custom_call.1}
  #allocation0 [shape = 'u32[]', space=smem, size = 0x4, offset = 0x4, fixed_abs, tag = 'smem constant byte address 0x4 - core index']
  #allocation1 [shape = 'u32[144,128]{1,0:T(1,128)}', space=vmem, size = 0x12000, scoped, tag = 'internal scratch']
  #allocation2 [shape = 'f32[8,256]{1,0:T(8,128)}', space=vmem, size = 0x2000, scoped, tag = 'scratch operand']
  %s0 = inlined_call_operand.hbm [shape: bf16[8,1024], index: 0, kind: input, shape index: {}]
  %s1 = inlined_call_operand.hbm [shape: bf16[1024,256], index: 1, kind: input, shape index: {}]
  %s2 = inlined_call_operand.vmem [shape: f32[1,256], index: 2, kind: input, shape index: {}]
  %s3 = inlined_call_operand.hbm [shape: f32[256,128], index: 3, kind: input, shape index: {}]
  %s4 = inlined_call_operand.vmem [shape: f32[1,128], index: 4, kind: input, shape index: {}]
  %s5 = inlined_call_operand.hbm [shape: f32[8,128], index: 5, kind: output, shape index: {}]
  %s6 = sld [smem:[#allocation0]]
  $region73: #{tpu_custom_call.1} parent=0
    _
  %s8 = ssub.s32 1, %s6
  %s9 = scalar_select 0, %s8, %s6
  $region1: #{tpu_custom_call.1} parent=0
    #allocation3 [shape = 'u8[16384]{0}', space=vmem, size = 0x4000, scoped, tag = 'input window, operand 0']
    #allocation4 [shape = 's32[2]{0}', space=sflag, size = 0x8, scoped, tag = 'scoped memory for tpu_custom_call.1']
    #allocation5 [shape = 's32[2]{0}', space=sflag, size = 0x8, scoped, tag = 'scoped memory for tpu_custom_call.1']
    #allocation6 [shape = 'u8[524288]{0}', space=vmem, size = 0x80000, scoped, tag = 'input window, operand 1']
    #allocation7 [shape = 's32[2]{0}', space=sflag, size = 0x8, scoped, tag = 'scoped memory for tpu_custom_call.1']
    #allocation8 [shape = 'u8[131072]{0}', space=vmem, size = 0x20000, scoped, tag = 'input window, operand 3, single buffered']
    #allocation9 [shape = 'u8[4096]{0}', space=vmem, size = 0x1000, scoped, tag = 'output window, operand 0, single buffered']
    %10 = vsyncpa [#allocation4], 0
    %s11 = scalar_lea.sflag [#allocation4], 1
    %12 = vsyncpa %s11, 0
    %13 = vsyncpa [#allocation7], 0
    %s14 = scalar_lea.sflag [#allocation7], 1
    %15 = vsyncpa %s14, 0
    %16 = vsyncpa [#allocation5], 0
    loop: start=0, step=1, limit=4
    $region2: #{tpu_custom_call.1} parent=1 // loop_pre_header
      _
    $region3: #{tpu_custom_call.1} parent=1 // loop_header
      %s18 = sphi 0, %s22
      %p19 = scmp.ge.s32.totalorder %s18, 4
      %s25 = sphi 0, %s37
      %s26 = sphi 0, %s33
      %s27 = sphi 0, %s25
      %s28 = sphi 0, %s26
      %s29 = sphi 0, %s27
      %s30 = sphi 0, %s28
      %s42 = sphi 0, %s44
      %s45 = sphi 0, %s42
      %s46 = sphi 0, %s45
      %s62 = sphi 0, %s46
      %s68 = sphi 0, %s70
      %s71 = sphi 0, %s68
      %s72 = sphi 0, %s71
      %s88 = sphi 0, %s72
      %s92 = sphi 0, %s92
      %s94 = sphi 0, %s92
      %s95 = sphi 0, %s94
      %s109 = sphi 0, %s95
      %s113 = sphi 0, %s113
      %s115 = sphi 0, %s113
      %s116 = sphi 0, %s115
      %s130 = sphi 0, %s116
      %s134 = sphi 0, %s134
      %s136 = sphi 0, %s134
      %s137 = sphi 0, %s136
      %s151 = sphi 0, %s137
      %s157 = sphi 0, %s159
      %s160 = sphi 0, %s157
      %s161 = sphi 0, %s160
      %s177 = sphi 0, %s161
    $region4: #{tpu_custom_call.1} parent=1 // loop_header_branch
      %21 = sbr.rel (%p19) target = $region8
    $region5: #{tpu_custom_call.1} parent=1 // loop_body
      %s23 = ssub.s32 %s18, 1
      %s24 = ssub.s32 %s18, 2
      %s31 = sadd.s32 1, %s26
      %p32 = scmp.ge.s32.totalorder %s31, 2
      %s33 = scalar_select %p32, 0, %s31
      %s34 = sadd.s32 1, %s25
      %s35 = scalar_select %p32, %s34, %s25
      %p36 = scmp.ge.s32.totalorder %s35, 1
      %s37 = scalar_select %p36, 0, %s35
      %s38 = ssub.s32 %s25, %s37
      %s39 = ssub.s32 %s26, %s33
      %s40 = sor.u32 %s38, %s39
      %p41 = scmp.eq.s32.totalorder %s40, 0
      %s43 = sadd.s32 %s42, 1
      %s44 = scalar_select %p41, %s42, %s43
      %p47 = pneg %p41
      %p48 = scmp.eq.s32.totalorder %s18, 1
      %p49 = por %p47, %p48
      %p50 = scmp.ne.s32.totalorder %s42, %s45
      %p51 = scmp.eq.s32.totalorder %s18, 0
      %p52 = por %p50, %p51
      %p53 = scmp.ne.s32.totalorder %s42, %s45
      %p54 = scmp.eq.s32.totalorder %s23, 1
      %p55 = por %p53, %p54
      %p56 = scmp.ne.s32.totalorder %s45, %s46
      %p57 = scmp.eq.s32.totalorder %s23, 0
      %p58 = por %p56, %p57
      %p59 = scmp.ne.s32.totalorder %s45, %s46
      %p60 = scmp.eq.s32.totalorder %s24, 1
      %p61 = por %p59, %p60
      %p63 = scmp.ne.s32.totalorder %s46, %s62
      %p64 = scmp.eq.s32.totalorder %s24, 0
      %p65 = por %p63, %p64
      %s66 = ssub.s32 %s26, %s33
      %p67 = scmp.eq.s32.totalorder %s66, 0
      %s69 = sadd.s32 %s68, 1
      %s70 = scalar_select %p67, %s68, %s69
      %p73 = pneg %p67
      %p74 = scmp.eq.s32.totalorder %s18, 1
      %p75 = por %p73, %p74
      %p76 = scmp.ne.s32.totalorder %s68, %s71
      %p77 = scmp.eq.s32.totalorder %s18, 0
      %p78 = por %p76, %p77
      %p79 = scmp.ne.s32.totalorder %s68, %s71
      %p80 = scmp.eq.s32.totalorder %s23, 1
      %p81 = por %p79, %p80
      %p82 = scmp.ne.s32.totalorder %s71, %s72
      %p83 = scmp.eq.s32.totalorder %s23, 0
      %p84 = por %p82, %p83
      %p85 = scmp.ne.s32.totalorder %s71, %s72
      %p86 = scmp.eq.s32.totalorder %s24, 1
      %p87 = por %p85, %p86
      %p89 = scmp.ne.s32.totalorder %s72, %s88
      %p90 = scmp.eq.s32.totalorder %s24, 0
      %p91 = por %p89, %p90
      %s93 = sadd.s32 %s92, 1
      %p96 = scmp.eq.s32.totalorder %s18, 1
      %p97 = scmp.ne.s32.totalorder %s92, %s94
      %p98 = scmp.eq.s32.totalorder %s18, 0
      %p99 = por %p97, %p98
      %p100 = scmp.ne.s32.totalorder %s92, %s94
      %p101 = scmp.eq.s32.totalorder %s23, 1
      %p102 = por %p100, %p101
      %p103 = scmp.ne.s32.totalorder %s94, %s95
      %p104 = scmp.eq.s32.totalorder %s23, 0
      %p105 = por %p103, %p104
      %p106 = scmp.ne.s32.totalorder %s94, %s95
      %p107 = scmp.eq.s32.totalorder %s24, 1
      %p108 = por %p106, %p107
      %p110 = scmp.ne.s32.totalorder %s95, %s109
      %p111 = scmp.eq.s32.totalorder %s24, 0
      %p112 = por %p110, %p111
      %s114 = sadd.s32 %s113, 1
      %p117 = scmp.eq.s32.totalorder %s18, 1
      %p118 = scmp.ne.s32.totalorder %s113, %s115
      %p119 = scmp.eq.s32.totalorder %s18, 0
      %p120 = por %p118, %p119
      %p121 = scmp.ne.s32.totalorder %s113, %s115
      %p122 = scmp.eq.s32.totalorder %s23, 1
      %p123 = por %p121, %p122
      %p124 = scmp.ne.s32.totalorder %s115, %s116
      %p125 = scmp.eq.s32.totalorder %s23, 0
      %p126 = por %p124, %p125
      %p127 = scmp.ne.s32.totalorder %s115, %s116
      %p128 = scmp.eq.s32.totalorder %s24, 1
      %p129 = por %p127, %p128
      %p131 = scmp.ne.s32.totalorder %s116, %s130
      %p132 = scmp.eq.s32.totalorder %s24, 0
      %p133 = por %p131, %p132
      %s135 = sadd.s32 %s134, 1
      %p138 = scmp.eq.s32.totalorder %s18, 1
      %p139 = scmp.ne.s32.totalorder %s134, %s136
      %p140 = scmp.eq.s32.totalorder %s18, 0
      %p141 = por %p139, %p140
      %p142 = scmp.ne.s32.totalorder %s134, %s136
      %p143 = scmp.eq.s32.totalorder %s23, 1
      %p144 = por %p142, %p143
      %p145 = scmp.ne.s32.totalorder %s136, %s137
      %p146 = scmp.eq.s32.totalorder %s23, 0
      %p147 = por %p145, %p146
      %p148 = scmp.ne.s32.totalorder %s136, %s137
      %p149 = scmp.eq.s32.totalorder %s24, 1
      %p150 = por %p148, %p149
      %p152 = scmp.ne.s32.totalorder %s137, %s151
      %p153 = scmp.eq.s32.totalorder %s24, 0
      %p154 = por %p152, %p153
      %s155 = ssub.s32 %s25, %s37
      %p156 = scmp.eq.s32.totalorder %s155, 0
      %s158 = sadd.s32 %s157, 1
      %s159 = scalar_select %p156, %s157, %s158
      %p162 = pneg %p156
      %p163 = scmp.eq.s32.totalorder %s18, 1
      %p164 = por %p162, %p163
      %p165 = scmp.ne.s32.totalorder %s157, %s160
      %p166 = scmp.eq.s32.totalorder %s18, 0
      %p167 = por %p165, %p166
      %p168 = scmp.ne.s32.totalorder %s157, %s160
      %p169 = scmp.eq.s32.totalorder %s23, 1
      %p170 = por %p168, %p169
      %p171 = scmp.ne.s32.totalorder %s160, %s161
      %p172 = scmp.eq.s32.totalorder %s23, 0
      %p173 = por %p171, %p172
      %p174 = scmp.ne.s32.totalorder %s160, %s161
      %p175 = scmp.eq.s32.totalorder %s24, 1
      %p176 = por %p174, %p175
      %p178 = scmp.ne.s32.totalorder %s161, %s177
      %p179 = scmp.eq.s32.totalorder %s24, 0
      %p180 = por %p178, %p179
      %p181 = scmp.le.s32.totalorder 1, %s18
      %p182 = scmp.lt.s32.totalorder %s18, 3
      %p183 = pnand %p181, %p182
      %p184 = pneg %p183
      // Predicated region
      $region9: #{tpu_custom_call.1} parent=5 // pred_check
        _
      $region10: #{tpu_custom_call.1} parent=5 // pred_check_branch
        %186 = sbr.rel (%p183) target = $region12
      $region11: #{tpu_custom_call.1} parent=5 // pred_region
        %s187 = ssub.s32 %s18, 1
        // Predicated region
        $region13: #{tpu_custom_call.1} parent=11 // pred_check
          %p188 = pneg %p105
        $region14: #{tpu_custom_call.1} parent=11 // pred_check_branch
          %190 = sbr.rel (%p188) target = $region16
        $region15: #{tpu_custom_call.1} parent=11 // pred_region
          _
        $region16: #{tpu_custom_call.1} parent=11 // pred_fallthru
          _
        // Predicated region
        $region17: #{tpu_custom_call.1} parent=11 // pred_check
          %p191 = pneg %p126
        $region18: #{tpu_custom_call.1} parent=11 // pred_check_branch
          %193 = sbr.rel (%p191) target = $region20
        $region19: #{tpu_custom_call.1} parent=11 // pred_region
          %s195 = ssub.s32 4096, 4096
          %196 = vsyncadd [#allocation7], %s195
          %s197 = sshll.u32 [#allocation8], 4
          %s198 = int_to_ptr.vmem [resolvable:$true] %s197
          %203 = dma.hbm_to_vmem [thread:$0]  %s3, 4096, %s198, [#allocation7], 128, 128, 8
        $region20: #{tpu_custom_call.1} parent=11 // pred_fallthru
          _
        // Predicated region
        $region21: #{tpu_custom_call.1} parent=11 // pred_check
          %p204 = pneg %p147
        $region22: #{tpu_custom_call.1} parent=11 // pred_check_branch
          %206 = sbr.rel (%p204) target = $region24
        $region23: #{tpu_custom_call.1} parent=11 // pred_region
          _
        $region24: #{tpu_custom_call.1} parent=11 // pred_fallthru
          _
      $region12: #{tpu_custom_call.1} parent=5 // pred_fallthru
        _
      %p207 = scmp.lt.s32.totalorder %s18, 2
      // Predicated region
      $region25: #{tpu_custom_call.1} parent=5 // pred_check
        %p208 = pneg %p207
      $region26: #{tpu_custom_call.1} parent=5 // pred_check_branch
        %210 = sbr.rel (%p208) target = $region28
      $region27: #{tpu_custom_call.1} parent=5 // pred_region
        // Predicated region
        $region29: #{tpu_custom_call.1} parent=27 // pred_check
          %p211 = pneg %p52
        $region30: #{tpu_custom_call.1} parent=27 // pred_check_branch
          %213 = sbr.rel (%p211) target = $region32
        $region31: #{tpu_custom_call.1} parent=27 // pred_region
          %s214 = sand.u32 %s42, 1
          %s215 = scalar_lea.sflag [#allocation4], %s214
          %s216 = sand.u32 %s42, 1
          %s217 = smul.addr %s216, 16
          %s218 = scalar_lea.vmem [#allocation3], %s217
          %s219 = smul.u32 4, %s26
          %s221 = ssub.s32 256, 256
          %222 = vsyncadd %s215, %s221
          %s223 = smul.addr %s25, 8
          %s224 = sadd.s32 %s219, %s223
          %s225 = smul.addr %s224, 64
          %s226 = scalar_lea.hbm %s0, %s225
          %s228 = sshll.u32 %s218, 4
          %s229 = int_to_ptr.vmem [resolvable:$true] %s228
          %231 = dma.hbm_to_vmem [thread:$0]  %s226, 256, %s229, %s215
        $region32: #{tpu_custom_call.1} parent=27 // pred_fallthru
          _
        // Predicated region
        $region33: #{tpu_custom_call.1} parent=27 // pred_check
          %p232 = pneg %p78
        $region34: #{tpu_custom_call.1} parent=27 // pred_check_branch
          %234 = sbr.rel (%p232) target = $region36
        $region35: #{tpu_custom_call.1} parent=27 // pred_region
          %s235 = sand.u32 %s18, 1
          %s236 = scalar_lea.sflag [#allocation7], %s235
          %s237 = sand.u32 %s68, 1
          %s238 = smul.addr %s237, 512
          %s239 = scalar_lea.vmem [#allocation6], %s238
          %s240 = smul.u32 64, %s26
          %s242 = ssub.s32 8192, 8192
          %243 = vsyncadd %s236, %s242
          %s244 = smul.addr %s240, 2
          %s245 = smul.addr %s244, 64
          %s246 = scalar_lea.hbm %s1, %s245
          %s247 = sshll.u32 %s239, 4
          %s248 = int_to_ptr.vmem [resolvable:$true] %s247
          %253 = dma.hbm_to_vmem [thread:$0]  %s246, 8192, %s248, %s236, 128, 128, 8
        $region36: #{tpu_custom_call.1} parent=27 // pred_fallthru
          _
      $region28: #{tpu_custom_call.1} parent=5 // pred_fallthru
        _
      %p254 = scmp.le.s32.totalorder 1, %s18
      %p255 = scmp.lt.s32.totalorder %s18, 3
      %p256 = pnand %p254, %p255
      %p257 = pneg %p256
      // Predicated region
      $region37: #{tpu_custom_call.1} parent=5 // pred_check
        _
      $region38: #{tpu_custom_call.1} parent=5 // pred_check_branch
        %259 = sbr.rel (%p256) target = $region40
      $region39: #{tpu_custom_call.1} parent=5 // pred_region
        %s260 = ssub.s32 %s18, 1
        %s261 = sand.u32 %s45, 1
        %s262 = scalar_lea.sflag [#allocation4], %s261
        %s263 = sand.u32 %s45, 1
        %s264 = smul.addr %s263, 16
        %s265 = scalar_lea.vmem [#allocation3], %s264
        // Predicated region
        $region41: #{tpu_custom_call.1} parent=39 // pred_check
          %p266 = pneg %p58
        $region42: #{tpu_custom_call.1} parent=39 // pred_check_branch
          %268 = sbr.rel (%p266) target = $region44
        $region43: #{tpu_custom_call.1} parent=39 // pred_region
          %269 = dma.done %s262, 256
        $region44: #{tpu_custom_call.1} parent=39 // pred_fallthru
          _
        %s270 = sand.u32 %s23, 1
        %s271 = scalar_lea.sflag [#allocation7], %s270
        %s272 = sand.u32 %s71, 1
        %s273 = smul.addr %s272, 512
        %s274 = scalar_lea.vmem [#allocation6], %s273
        // Predicated region
        $region45: #{tpu_custom_call.1} parent=39 // pred_check
          %p275 = pneg %p84
        $region46: #{tpu_custom_call.1} parent=39 // pred_check_branch
          %277 = sbr.rel (%p275) target = $region48
        $region47: #{tpu_custom_call.1} parent=39 // pred_region
          %278 = dma.done %s271, 8192
        $region48: #{tpu_custom_call.1} parent=39 // pred_fallthru
          _
        // Predicated region
        $region49: #{tpu_custom_call.1} parent=39 // pred_check
          %p279 = pneg %p126
        $region50: #{tpu_custom_call.1} parent=39 // pred_check_branch
          %281 = sbr.rel (%p279) target = $region52
        $region51: #{tpu_custom_call.1} parent=39 // pred_region
          %282 = dma.done [#allocation7], 4096
        $region52: #{tpu_custom_call.1} parent=39 // pred_fallthru
          _
        %s283 = sand.u32 %s45, 1
        %s284 = scalar_lea.sflag [#allocation4], %s283
        %s285 = sand.u32 %s45, 1
        %s286 = smul.addr %s285, 16
        %s287 = scalar_lea.vmem [#allocation3], %s286
        %p288 = pneg %p58
        %p289 = pneg %p55
        %s290 = sand.u32 %s23, 1
        %s291 = scalar_lea.sflag [#allocation7], %s290
        %s292 = sand.u32 %s71, 1
        %s293 = smul.addr %s292, 512
        %s294 = scalar_lea.vmem [#allocation6], %s293
        %p295 = pneg %p84
        %p296 = pneg %p81
        %p297 = pneg %p105
        %p298 = pneg %p102
        %p299 = pneg %p126
        %p300 = pneg %p123
        %p301 = pneg %p147
        %p302 = pneg %p144
        %p303 = pneg %p173
        %p304 = pneg %p170
        %s305 = smul.u32 4, %s28
        %s306 = smul.u32 64, %s28
        %p307 = scmp.eq.s32.totalorder %s28, 0
        // Predicated region
        $region53: #{tpu_custom_call.1} parent=39 // pred_check
          %p308 = pneg %p307
        $region54: #{tpu_custom_call.1} parent=39 // pred_check_branch
          %310 = sbr.rel (%p308) target = $region56
        $region55: #{tpu_custom_call.1} parent=39 // pred_region
          %311 = vst [vmem:[#allocation2] sm:$0xff] 0.0
          %312 = vst [vmem:[#allocation2 + $0x8] sm:$0xff] 0.0
        $region56: #{tpu_custom_call.1} parent=39 // pred_fallthru
          _
        %v313 = vld [vmem:[#allocation2] sm:$0xff]
        %v314 = vld [vmem:[#allocation2 + $0x8] sm:$0xff]
        %v315 = vld [vmem:[%s265] sm:$0xff]
        %v316 = vld [vmem:[%s265 + $0x8] sm:$0xff]
        %v317 = vld [vmem:[%s274] sm:$0xff]
        %v318 = vld [vmem:[%s274 + $0x8] sm:$0xff]
        %v319 = vld [vmem:[%s274 + $0x10] sm:$0xff]
        %v320 = vld [vmem:[%s274 + $0x18] sm:$0xff]
        %v321 = vld [vmem:[%s274 + $0x20] sm:$0xff]
        %v322 = vld [vmem:[%s274 + $0x28] sm:$0xff]
        %v323 = vld [vmem:[%s274 + $0x30] sm:$0xff]
        %v324 = vld [vmem:[%s274 + $0x38] sm:$0xff]
        %v325 = vld [vmem:[%s274 + $0x40] sm:$0xff]
        %v326 = vld [vmem:[%s274 + $0x48] sm:$0xff]
        %v327 = vld [vmem:[%s274 + $0x50] sm:$0xff]
        %v328 = vld [vmem:[%s274 + $0x58] sm:$0xff]
        %v329 = vld [vmem:[%s274 + $0x60] sm:$0xff]
        %v330 = vld [vmem:[%s274 + $0x68] sm:$0xff]
        %v331 = vld [vmem:[%s274 + $0x70] sm:$0xff]
        %v332 = vld [vmem:[%s274 + $0x78] sm:$0xff]
        %v333 = vld [vmem:[%s274 + $0x80] sm:$0xff]
        %v334 = vld [vmem:[%s274 + $0x88] sm:$0xff]
        %v335 = vld [vmem:[%s274 + $0x90] sm:$0xff]
        %v336 = vld [vmem:[%s274 + $0x98] sm:$0xff]
        %v337 = vld [vmem:[%s274 + $0xa0] sm:$0xff]
        %v338 = vld [vmem:[%s274 + $0xa8] sm:$0xff]
        %v339 = vld [vmem:[%s274 + $0xb0] sm:$0xff]
        %v340 = vld [vmem:[%s274 + $0xb8] sm:$0xff]
        %v341 = vld [vmem:[%s274 + $0xc0] sm:$0xff]
        %v342 = vld [vmem:[%s274 + $0xc8] sm:$0xff]
        %v343 = vld [vmem:[%s274 + $0xd0] sm:$0xff]
        %v344 = vld [vmem:[%s274 + $0xd8] sm:$0xff]
        %v345 = vld [vmem:[%s274 + $0xe0] sm:$0xff]
        %v346 = vld [vmem:[%s274 + $0xe8] sm:$0xff]
        %v347 = vld [vmem:[%s274 + $0xf0] sm:$0xff]
        %v348 = vld [vmem:[%s274 + $0xf8] sm:$0xff]
        %v349 = vld [vmem:[%s274 + $0x100] sm:$0xff]
        %v350 = vld [vmem:[%s274 + $0x108] sm:$0xff]
        %v351 = vld [vmem:[%s274 + $0x110] sm:$0xff]
        %v352 = vld [vmem:[%s274 + $0x118] sm:$0xff]
        %v353 = vld [vmem:[%s274 + $0x120] sm:$0xff]
        %v354 = vld [vmem:[%s274 + $0x128] sm:$0xff]
        %v355 = vld [vmem:[%s274 + $0x130] sm:$0xff]
        %v356 = vld [vmem:[%s274 + $0x138] sm:$0xff]
        %v357 = vld [vmem:[%s274 + $0x140] sm:$0xff]
        %v358 = vld [vmem:[%s274 + $0x148] sm:$0xff]
        %v359 = vld [vmem:[%s274 + $0x150] sm:$0xff]
        %v360 = vld [vmem:[%s274 + $0x158] sm:$0xff]
        %v361 = vld [vmem:[%s274 + $0x160] sm:$0xff]
        %v362 = vld [vmem:[%s274 + $0x168] sm:$0xff]
        %v363 = vld [vmem:[%s274 + $0x170] sm:$0xff]
        %v364 = vld [vmem:[%s274 + $0x178] sm:$0xff]
        %v365 = vld [vmem:[%s274 + $0x180] sm:$0xff]
        %v366 = vld [vmem:[%s274 + $0x188] sm:$0xff]
        %v367 = vld [vmem:[%s274 + $0x190] sm:$0xff]
        %v368 = vld [vmem:[%s274 + $0x198] sm:$0xff]
        %v369 = vld [vmem:[%s274 + $0x1a0] sm:$0xff]
        %v370 = vld [vmem:[%s274 + $0x1a8] sm:$0xff]
        %v371 = vld [vmem:[%s274 + $0x1b0] sm:$0xff]
        %v372 = vld [vmem:[%s274 + $0x1b8] sm:$0xff]
        %v373 = vld [vmem:[%s274 + $0x1c0] sm:$0xff]
        %v374 = vld [vmem:[%s274 + $0x1c8] sm:$0xff]
        %v375 = vld [vmem:[%s274 + $0x1d0] sm:$0xff]
        %v376 = vld [vmem:[%s274 + $0x1d8] sm:$0xff]
        %v377 = vld [vmem:[%s274 + $0x1e0] sm:$0xff]
        %v378 = vld [vmem:[%s274 + $0x1e8] sm:$0xff]
        %v379 = vld [vmem:[%s274 + $0x1f0] sm:$0xff]
        %v380 = vld [vmem:[%s274 + $0x1f8] sm:$0xff]
        %v383 = vunpack.c.l.b16 %v315
        %v384 = vunpack.c.h.b16 %v315
        %v385 = vunpack.c.l.b16 %v316
        %v386 = vunpack.c.h.b16 %v316
        %v387 = vpack.c.b16 %v383, %v383
        %v388 = vpack.c.b16 %v384, %v384
        %v389 = vpack.c.b16 %v385, %v385
        %v390 = vpack.c.b16 %v386, %v386
        %v459 = vunpack.c.l.b16 %v317
        %v460 = vunpack.c.h.b16 %v317
        %v461 = vunpack.c.l.b16 %v318
        %v462 = vunpack.c.h.b16 %v318
        %v463 = vunpack.c.l.b16 %v319
        %v464 = vunpack.c.h.b16 %v319
        %v465 = vunpack.c.l.b16 %v320
        %v466 = vunpack.c.h.b16 %v320
        %v467 = vunpack.c.l.b16 %v321
        %v468 = vunpack.c.h.b16 %v321
        %v469 = vunpack.c.l.b16 %v322
        %v470 = vunpack.c.h.b16 %v322
        %v471 = vunpack.c.l.b16 %v323
        %v472 = vunpack.c.h.b16 %v323
        %v473 = vunpack.c.l.b16 %v324
        %v474 = vunpack.c.h.b16 %v324
        %v475 = vunpack.c.l.b16 %v325
        %v476 = vunpack.c.h.b16 %v325
        %v477 = vunpack.c.l.b16 %v326
        %v478 = vunpack.c.h.b16 %v326
        %v479 = vunpack.c.l.b16 %v327
        %v480 = vunpack.c.h.b16 %v327
        %v481 = vunpack.c.l.b16 %v328
        %v482 = vunpack.c.h.b16 %v328
        %v483 = vunpack.c.l.b16 %v329
        %v484 = vunpack.c.h.b16 %v329
        %v485 = vunpack.c.l.b16 %v330
        %v486 = vunpack.c.h.b16 %v330
        %v487 = vunpack.c.l.b16 %v331
        %v488 = vunpack.c.h.b16 %v331
        %v489 = vunpack.c.l.b16 %v332
        %v490 = vunpack.c.h.b16 %v332
        %v491 = vunpack.c.l.b16 %v333
        %v492 = vunpack.c.h.b16 %v333
        %v493 = vunpack.c.l.b16 %v334
        %v494 = vunpack.c.h.b16 %v334
        %v495 = vunpack.c.l.b16 %v335
        %v496 = vunpack.c.h.b16 %v335
        %v497 = vunpack.c.l.b16 %v336
        %v498 = vunpack.c.h.b16 %v336
        %v499 = vunpack.c.l.b16 %v337
        %v500 = vunpack.c.h.b16 %v337
        %v501 = vunpack.c.l.b16 %v338
        %v502 = vunpack.c.h.b16 %v338
        %v503 = vunpack.c.l.b16 %v339
        %v504 = vunpack.c.h.b16 %v339
        %v505 = vunpack.c.l.b16 %v340
        %v506 = vunpack.c.h.b16 %v340
        %v507 = vunpack.c.l.b16 %v341
        %v508 = vunpack.c.h.b16 %v341
        %v509 = vunpack.c.l.b16 %v342
        %v510 = vunpack.c.h.b16 %v342
        %v511 = vunpack.c.l.b16 %v343
        %v512 = vunpack.c.h.b16 %v343
        %v513 = vunpack.c.l.b16 %v344
        %v514 = vunpack.c.h.b16 %v344
        %v515 = vunpack.c.l.b16 %v345
        %v516 = vunpack.c.h.b16 %v345
        %v517 = vunpack.c.l.b16 %v346
        %v518 = vunpack.c.h.b16 %v346
        %v519 = vunpack.c.l.b16 %v347
        %v520 = vunpack.c.h.b16 %v347
        %v521 = vunpack.c.l.b16 %v348
        %v522 = vunpack.c.h.b16 %v348
        %v523 = vunpack.c.l.b16 %v349
        %v524 = vunpack.c.h.b16 %v349
        %v525 = vunpack.c.l.b16 %v350
        %v526 = vunpack.c.h.b16 %v350
        %v527 = vunpack.c.l.b16 %v351
        %v528 = vunpack.c.h.b16 %v351
        %v529 = vunpack.c.l.b16 %v352
        %v530 = vunpack.c.h.b16 %v352
        %v531 = vunpack.c.l.b16 %v353
        %v532 = vunpack.c.h.b16 %v353
        %v533 = vunpack.c.l.b16 %v354
        %v534 = vunpack.c.h.b16 %v354
        %v535 = vunpack.c.l.b16 %v355
        %v536 = vunpack.c.h.b16 %v355
        %v537 = vunpack.c.l.b16 %v356
        %v538 = vunpack.c.h.b16 %v356
        %v539 = vunpack.c.l.b16 %v357
        %v540 = vunpack.c.h.b16 %v357
        %v541 = vunpack.c.l.b16 %v358
        %v542 = vunpack.c.h.b16 %v358
        %v543 = vunpack.c.l.b16 %v359
        %v544 = vunpack.c.h.b16 %v359
        %v545 = vunpack.c.l.b16 %v360
        %v546 = vunpack.c.h.b16 %v360
        %v547 = vunpack.c.l.b16 %v361
        %v548 = vunpack.c.h.b16 %v361
        %v549 = vunpack.c.l.b16 %v362
        %v550 = vunpack.c.h.b16 %v362
        %v551 = vunpack.c.l.b16 %v363
        %v552 = vunpack.c.h.b16 %v363
        %v553 = vunpack.c.l.b16 %v364
        %v554 = vunpack.c.h.b16 %v364
        %v555 = vunpack.c.l.b16 %v365
        %v556 = vunpack.c.h.b16 %v365
        %v557 = vunpack.c.l.b16 %v366
        %v558 = vunpack.c.h.b16 %v366
        %v559 = vunpack.c.l.b16 %v367
        %v560 = vunpack.c.h.b16 %v367
        %v561 = vunpack.c.l.b16 %v368
        %v562 = vunpack.c.h.b16 %v368
        %v563 = vunpack.c.l.b16 %v369
        %v564 = vunpack.c.h.b16 %v369
        %v565 = vunpack.c.l.b16 %v370
        %v566 = vunpack.c.h.b16 %v370
        %v567 = vunpack.c.l.b16 %v371
        %v568 = vunpack.c.h.b16 %v371
        %v569 = vunpack.c.l.b16 %v372
        %v570 = vunpack.c.h.b16 %v372
        %v571 = vunpack.c.l.b16 %v373
        %v572 = vunpack.c.h.b16 %v373
        %v573 = vunpack.c.l.b16 %v374
        %v574 = vunpack.c.h.b16 %v374
        %v575 = vunpack.c.l.b16 %v375
        %v576 = vunpack.c.h.b16 %v375
        %v577 = vunpack.c.l.b16 %v376
        %v578 = vunpack.c.h.b16 %v376
        %v579 = vunpack.c.l.b16 %v377
        %v580 = vunpack.c.h.b16 %v377
        %v581 = vunpack.c.l.b16 %v378
        %v582 = vunpack.c.h.b16 %v378
        %v583 = vunpack.c.l.b16 %v379
        %v584 = vunpack.c.h.b16 %v379
        %v585 = vunpack.c.l.b16 %v380
        %v586 = vunpack.c.h.b16 %v380
        %v587 = vpack.c.b16 %v461, %v459
        %v588 = vpack.c.b16 %v462, %v460
        %v589 = vpack.c.b16 %v465, %v463
        %v590 = vpack.c.b16 %v466, %v464
        %v591 = vpack.c.b16 %v469, %v467
        %v592 = vpack.c.b16 %v470, %v468
        %v593 = vpack.c.b16 %v473, %v471
        %v594 = vpack.c.b16 %v474, %v472
        %v595 = vpack.c.b16 %v477, %v475
        %v596 = vpack.c.b16 %v478, %v476
        %v597 = vpack.c.b16 %v481, %v479
        %v598 = vpack.c.b16 %v482, %v480
        %v599 = vpack.c.b16 %v485, %v483
        %v600 = vpack.c.b16 %v486, %v484
        %v601 = vpack.c.b16 %v489, %v487
        %v602 = vpack.c.b16 %v490, %v488
        %v603 = vpack.c.b16 %v493, %v491
        %v604 = vpack.c.b16 %v494, %v492
        %v605 = vpack.c.b16 %v497, %v495
        %v606 = vpack.c.b16 %v498, %v496
        %v607 = vpack.c.b16 %v501, %v499
        %v608 = vpack.c.b16 %v502, %v500
        %v609 = vpack.c.b16 %v505, %v503
        %v610 = vpack.c.b16 %v506, %v504
        %v611 = vpack.c.b16 %v509, %v507
        %v612 = vpack.c.b16 %v510, %v508
        %v613 = vpack.c.b16 %v513, %v511
        %v614 = vpack.c.b16 %v514, %v512
        %v615 = vpack.c.b16 %v517, %v515
        %v616 = vpack.c.b16 %v518, %v516
        %v617 = vpack.c.b16 %v521, %v519
        %v618 = vpack.c.b16 %v522, %v520
        %v619 = vpack.c.b16 %v525, %v523
        %v620 = vpack.c.b16 %v526, %v524
        %v621 = vpack.c.b16 %v529, %v527
        %v622 = vpack.c.b16 %v530, %v528
        %v623 = vpack.c.b16 %v533, %v531
        %v624 = vpack.c.b16 %v534, %v532
        %v625 = vpack.c.b16 %v537, %v535
        %v626 = vpack.c.b16 %v538, %v536
        %v627 = vpack.c.b16 %v541, %v539
        %v628 = vpack.c.b16 %v542, %v540
        %v629 = vpack.c.b16 %v545, %v543
        %v630 = vpack.c.b16 %v546, %v544
        %v631 = vpack.c.b16 %v549, %v547
        %v632 = vpack.c.b16 %v550, %v548
        %v633 = vpack.c.b16 %v553, %v551
        %v634 = vpack.c.b16 %v554, %v552
        %v635 = vpack.c.b16 %v557, %v555
        %v636 = vpack.c.b16 %v558, %v556
        %v637 = vpack.c.b16 %v561, %v559
        %v638 = vpack.c.b16 %v562, %v560
        %v639 = vpack.c.b16 %v565, %v563
        %v640 = vpack.c.b16 %v566, %v564
        %v641 = vpack.c.b16 %v569, %v567
        %v642 = vpack.c.b16 %v570, %v568
        %v643 = vpack.c.b16 %v573, %v571
        %v644 = vpack.c.b16 %v574, %v572
        %v645 = vpack.c.b16 %v577, %v575
        %v646 = vpack.c.b16 %v578, %v576
        %v647 = vpack.c.b16 %v581, %v579
        %v648 = vpack.c.b16 %v582, %v580
        %v649 = vpack.c.b16 %v585, %v583
        %v650 = vpack.c.b16 %v586, %v584
        %715 = vmatprep.subr.bf16.mxu0 %v588
        %716 = vmatpush1.bf16.msra.mxu0 %v587
        %717 = vmatprep.subr.bf16.mxu0 %v590
        %718 = vmatpush1.bf16.msra.mxu0 %v589
        %719 = vmatprep.subr.bf16.mxu0 %v592
        %720 = vmatpush1.bf16.msra.mxu0 %v591
        %721 = vmatprep.subr.bf16.mxu0 %v594
        %722 = vmatpush1.bf16.msra.mxu0 %v593
        %723 = vmatprep.subr.bf16.mxu0 %v596
        %724 = vmatpush1.bf16.msra.mxu0 %v595
        %725 = vmatprep.subr.bf16.mxu0 %v598
        %726 = vmatpush1.bf16.msra.mxu0 %v597
        %727 = vmatprep.subr.bf16.mxu0 %v600
        %728 = vmatpush1.bf16.msra.mxu0 %v599
        %729 = vmatprep.subr.bf16.mxu0 %v602
        %730 = vmatpush1.bf16.msra.mxu0 %v601
        %731 = vmatprep.subr.bf16.mxu0 %v604
        %732 = vmatpush1.bf16.msra.mxu0 %v603
        %733 = vmatprep.subr.bf16.mxu0 %v606
        %734 = vmatpush1.bf16.msra.mxu0 %v605
        %735 = vmatprep.subr.bf16.mxu0 %v608
        %736 = vmatpush1.bf16.msra.mxu0 %v607
        %737 = vmatprep.subr.bf16.mxu0 %v610
        %738 = vmatpush1.bf16.msra.mxu0 %v609
        %739 = vmatprep.subr.bf16.mxu0 %v612
        %740 = vmatpush1.bf16.msra.mxu0 %v611
        %741 = vmatprep.subr.bf16.mxu0 %v614
        %742 = vmatpush1.bf16.msra.mxu0 %v613
        %743 = vmatprep.subr.bf16.mxu0 %v616
        %744 = vmatpush1.bf16.msra.mxu0 %v615
        %745 = vmatprep.subr.bf16.mxu0 %v618
        %746 = vmatpush1.bf16.msra.mxu0 %v617
        %747 = vmatprep.mubr.bf16.mxu0 %v388
        %748 = vmatmul.mubr.bf16.gmra.mrb[0].mxu0 %v387
        %v749 = vpop.f32.mrb[0].mxu0
        %v750 = vadd.f32 0.0, %v749
        %v751 = vpop.f32.mrb[0].mxu0
        %v752 = vadd.f32 0.0, %v751
        %v753 = vpop.f32.mrb[0].mxu0
        %v754 = vpop.f32.mrb[0].mxu0
        %755 = vdwg.mxu0
        %756 = vmatprep.subr.bf16.mxu0 %v620
        %757 = vmatpush1.bf16.msra.mxu0 %v619
        %758 = vmatprep.subr.bf16.mxu0 %v622
        %759 = vmatpush1.bf16.msra.mxu0 %v621
        %760 = vmatprep.subr.bf16.mxu0 %v624
        %761 = vmatpush1.bf16.msra.mxu0 %v623
        %762 = vmatprep.subr.bf16.mxu0 %v626
        %763 = vmatpush1.bf16.msra.mxu0 %v625
        %764 = vmatprep.subr.bf16.mxu0 %v628
        %765 = vmatpush1.bf16.msra.mxu0 %v627
        %766 = vmatprep.subr.bf16.mxu0 %v630
        %767 = vmatpush1.bf16.msra.mxu0 %v629
        %768 = vmatprep.subr.bf16.mxu0 %v632
        %769 = vmatpush1.bf16.msra.mxu0 %v631
        %770 = vmatprep.subr.bf16.mxu0 %v634
        %771 = vmatpush1.bf16.msra.mxu0 %v633
        %772 = vmatprep.subr.bf16.mxu0 %v636
        %773 = vmatpush1.bf16.msra.mxu0 %v635
        %774 = vmatprep.subr.bf16.mxu0 %v638
        %775 = vmatpush1.bf16.msra.mxu0 %v637
        %776 = vmatprep.subr.bf16.mxu0 %v640
        %777 = vmatpush1.bf16.msra.mxu0 %v639
        %778 = vmatprep.subr.bf16.mxu0 %v642
        %779 = vmatpush1.bf16.msra.mxu0 %v641
        %780 = vmatprep.subr.bf16.mxu0 %v644
        %781 = vmatpush1.bf16.msra.mxu0 %v643
        %782 = vmatprep.subr.bf16.mxu0 %v646
        %783 = vmatpush1.bf16.msra.mxu0 %v645
        %784 = vmatprep.subr.bf16.mxu0 %v648
        %785 = vmatpush1.bf16.msra.mxu0 %v647
        %786 = vmatprep.subr.bf16.mxu0 %v650
        %787 = vmatpush1.bf16.msra.mxu0 %v649
        %788 = vmatprep.mubr.bf16.mxu0 %v390
        %789 = vmatmul.mubr.bf16.gmra.mrb[0].mxu0 %v389
        %v790 = vpop.f32.mrb[0].mxu0
        %v791 = vadd.f32 %v750, %v790
        %v792 = vpop.f32.mrb[0].mxu0
        %v793 = vadd.f32 %v752, %v792
        %v794 = vpop.f32.mrb[0].mxu0
        %v795 = vpop.f32.mrb[0].mxu0
        %796 = vdwg.mxu0
        %v797 = vadd.f32 %v313, %v791
        %v798 = vadd.f32 %v314, %v793
        %799 = vst [vmem:[#allocation2] sm:$0xff] %v797
        %800 = vst [vmem:[#allocation2 + $0x8] sm:$0xff] %v798
        %p801 = scmp.eq.s32.totalorder %s28, 1
        // Predicated region
        $region57: #{tpu_custom_call.1} parent=39 // pred_check
          %p802 = pneg %p801
        $region58: #{tpu_custom_call.1} parent=39 // pred_check_branch
          %804 = sbr.rel (%p802) target = $region60
        $region59: #{tpu_custom_call.1} parent=39 // pred_region
          %v805 = vld [vmem:[#allocation2] sm:$0xff]
          %v806 = vld [vmem:[#allocation2 + $0x8] sm:$0xff]
          %v807 = vld [vmem:[%s2] sm:$0x3]
          %v809 = vlaneseq
          %v810 = vshrl.u32 %v809, 7
          %v811 = vsub.s32 0, %v810
          %v812 = vrot.slane %v807, %v811
          %v813 = vlaneseq
          %v814 = vshrl.u32 %v813, 7
          %v815 = vsub.s32 1, %v814
          %v816 = vrot.slane %v807, %v815
          %v819 = vadd.f32 %v805, %v812
          %v820 = vadd.f32 %v806, %v816
          %v821 = vmax.f32 %v819, 0.0
          %v822 = vmax.f32 %v820, 0.0
          %v823 = vld [vmem:[#allocation8] sm:$0xff]
          %v824 = vld [vmem:[#allocation8 + $0x8] sm:$0xff]
          %v825 = vld [vmem:[#allocation8 + $0x10] sm:$0xff]
          %v826 = vld [vmem:[#allocation8 + $0x18] sm:$0xff]
          %v827 = vld [vmem:[#allocation8 + $0x20] sm:$0xff]
          %v828 = vld [vmem:[#allocation8 + $0x28] sm:$0xff]
          %v829 = vld [vmem:[#allocation8 + $0x30] sm:$0xff]
          %v830 = vld [vmem:[#allocation8 + $0x38] sm:$0xff]
          %v831 = vld [vmem:[#allocation8 + $0x40] sm:$0xff]
          %v832 = vld [vmem:[#allocation8 + $0x48] sm:$0xff]
          %v833 = vld [vmem:[#allocation8 + $0x50] sm:$0xff]
          %v834 = vld [vmem:[#allocation8 + $0x58] sm:$0xff]
          %v835 = vld [vmem:[#allocation8 + $0x60] sm:$0xff]
          %v836 = vld [vmem:[#allocation8 + $0x68] sm:$0xff]
          %v837 = vld [vmem:[#allocation8 + $0x70] sm:$0xff]
          %v838 = vld [vmem:[#allocation8 + $0x78] sm:$0xff]
          %v839 = vld [vmem:[#allocation8 + $0x80] sm:$0xff]
          %v840 = vld [vmem:[#allocation8 + $0x88] sm:$0xff]
          %v841 = vld [vmem:[#allocation8 + $0x90] sm:$0xff]
          %v842 = vld [vmem:[#allocation8 + $0x98] sm:$0xff]
          %v843 = vld [vmem:[#allocation8 + $0xa0] sm:$0xff]
          %v844 = vld [vmem:[#allocation8 + $0xa8] sm:$0xff]
          %v845 = vld [vmem:[#allocation8 + $0xb0] sm:$0xff]
          %v846 = vld [vmem:[#allocation8 + $0xb8] sm:$0xff]
          %v847 = vld [vmem:[#allocation8 + $0xc0] sm:$0xff]
          %v848 = vld [vmem:[#allocation8 + $0xc8] sm:$0xff]
          %v849 = vld [vmem:[#allocation8 + $0xd0] sm:$0xff]
          %v850 = vld [vmem:[#allocation8 + $0xd8] sm:$0xff]
          %v851 = vld [vmem:[#allocation8 + $0xe0] sm:$0xff]
          %v852 = vld [vmem:[#allocation8 + $0xe8] sm:$0xff]
          %v853 = vld [vmem:[#allocation8 + $0xf0] sm:$0xff]
          %v854 = vld [vmem:[#allocation8 + $0xf8] sm:$0xff]
          %v855 = vld [vmem:[%s4] sm:$0x1]
          %v857 = vlaneseq
          %v858 = vshrl.u32 %v857, 7
          %v859 = vsub.s32 0, %v858
          %v860 = vrot.slane %v855, %v859
          %862 = vmatprep.subr.mxu0 0.0
          %863 = vmatpush1.msra.mxu0 %v823
          %864 = vmatprep.subr.mxu0 0.0
          %865 = vmatpush1.msra.mxu0 %v824
          %866 = vmatprep.subr.mxu0 0.0
          %867 = vmatpush1.msra.mxu0 %v825
          %868 = vmatprep.subr.mxu0 0.0
          %869 = vmatpush1.msra.mxu0 %v826
          %870 = vmatprep.subr.mxu0 0.0
          %871 = vmatpush1.msra.mxu0 %v827
          %872 = vmatprep.subr.mxu0 0.0
          %873 = vmatpush1.msra.mxu0 %v828
          %874 = vmatprep.subr.mxu0 0.0
          %875 = vmatpush1.msra.mxu0 %v829
          %876 = vmatprep.subr.mxu0 0.0
          %877 = vmatpush1.msra.mxu0 %v830
          %878 = vmatprep.subr.mxu0 0.0
          %879 = vmatpush1.msra.mxu0 %v831
          %880 = vmatprep.subr.mxu0 0.0
          %881 = vmatpush1.msra.mxu0 %v832
          %882 = vmatprep.subr.mxu0 0.0
          %883 = vmatpush1.msra.mxu0 %v833
          %884 = vmatprep.subr.mxu0 0.0
          %885 = vmatpush1.msra.mxu0 %v834
          %886 = vmatprep.subr.mxu0 0.0
          %887 = vmatpush1.msra.mxu0 %v835
          %888 = vmatprep.subr.mxu0 0.0
          %889 = vmatpush1.msra.mxu0 %v836
          %890 = vmatprep.subr.mxu0 0.0
          %891 = vmatpush1.msra.mxu0 %v837
          %892 = vmatprep.subr.mxu0 0.0
          %893 = vmatpush1.msra.mxu0 %v838
          %894 = vmatprep.subr.mxu0 0.0
          %895 = vmatpush1.msra.mxu0 %v839
          %896 = vmatprep.subr.mxu0 0.0
          %897 = vmatpush1.msra.mxu0 %v840
          %898 = vmatprep.subr.mxu0 0.0
          %899 = vmatpush1.msra.mxu0 %v841
          %900 = vmatprep.subr.mxu0 0.0
          %901 = vmatpush1.msra.mxu0 %v842
          %902 = vmatprep.subr.mxu0 0.0
          %903 = vmatpush1.msra.mxu0 %v843
          %904 = vmatprep.subr.mxu0 0.0
          %905 = vmatpush1.msra.mxu0 %v844
          %906 = vmatprep.subr.mxu0 0.0
          %907 = vmatpush1.msra.mxu0 %v845
          %908 = vmatprep.subr.mxu0 0.0
          %909 = vmatpush1.msra.mxu0 %v846
          %910 = vmatprep.subr.mxu0 0.0
          %911 = vmatpush1.msra.mxu0 %v847
          %912 = vmatprep.subr.mxu0 0.0
          %913 = vmatpush1.msra.mxu0 %v848
          %914 = vmatprep.subr.mxu0 0.0
          %915 = vmatpush1.msra.mxu0 %v849
          %916 = vmatprep.subr.mxu0 0.0
          %917 = vmatpush1.msra.mxu0 %v850
          %918 = vmatprep.subr.mxu0 0.0
          %919 = vmatpush1.msra.mxu0 %v851
          %920 = vmatprep.subr.mxu0 0.0
          %921 = vmatpush1.msra.mxu0 %v852
          %922 = vmatprep.subr.mxu0 0.0
          %923 = vmatpush1.msra.mxu0 %v853
          %924 = vmatprep.subr.mxu0 0.0
          %925 = vmatpush1.msra.mxu0 %v854
          %926 = vmatprep.mubr.f32.mxu0 %v822
          %927 = vmatmul.mubr.f32.gmra.mrb[0].mxu0 %v821
          %v928 = vpop.f32.mrb[0].mxu0
          %v929 = vadd.f32 %v860, %v928
          %v930 = vpop.f32.mrb[0].mxu0
          %931 = vdwg.mxu0
          %932 = vst [vmem:[#allocation9] sm:$0xff] %v929
        $region60: #{tpu_custom_call.1} parent=39 // pred_fallthru
          _
        // Predicated region
        $region61: #{tpu_custom_call.1} parent=39 // pred_check
          %p933 = pneg %p170
        $region62: #{tpu_custom_call.1} parent=39 // pred_check_branch
          %935 = sbr.rel (%p933) target = $region64
        $region63: #{tpu_custom_call.1} parent=39 // pred_region
          %s937 = ssub.s32 128, 128
          %938 = vsyncadd [#allocation5], %s937
          %s939 = smul.addr %s27, 128
          %s940 = scalar_lea.hbm %s5, %s939
          %s942 = sshll.u32 [#allocation9], 4
          %s943 = int_to_ptr.vmem [resolvable:$true] %s942
          %945 = dma.vmem_to_hbm [thread:$0]  %s943, 128, %s940, [#allocation5]
        $region64: #{tpu_custom_call.1} parent=39 // pred_fallthru
          _
        // Predicated region
        $region65: #{tpu_custom_call.1} parent=39 // pred_check
          %p946 = pneg %p170
        $region66: #{tpu_custom_call.1} parent=39 // pred_check_branch
          %948 = sbr.rel (%p946) target = $region68
        $region67: #{tpu_custom_call.1} parent=39 // pred_region
          %949 = dma.done [#allocation5], 128
        $region68: #{tpu_custom_call.1} parent=39 // pred_fallthru
          _
      $region40: #{tpu_custom_call.1} parent=5 // pred_fallthru
        _
      %p950 = scmp.le.s32.totalorder 2, %s18
      // Predicated region
      $region69: #{tpu_custom_call.1} parent=5 // pred_check
        %p951 = pneg %p950
      $region70: #{tpu_custom_call.1} parent=5 // pred_check_branch
        %953 = sbr.rel (%p951) target = $region72
      $region71: #{tpu_custom_call.1} parent=5 // pred_region
        %s954 = ssub.s32 %s18, 2
      $region72: #{tpu_custom_call.1} parent=5 // pred_fallthru
        _
    $region6: #{tpu_custom_call.1} parent=1 // loop_footer
      %s22 = sadd.s32 1, %s18
    $region7: #{tpu_custom_call.1} parent=1 // loop_footer_branch
      %17 = sbr.rel target = $region3
    $region8: #{tpu_custom_call.1} parent=1 // loop_exit
      _
    %955 = vsyncpa [#allocation4], 1
    %s956 = scalar_lea.sflag [#allocation4], 1
    %957 = vsyncpa %s956, 1
    %958 = vsyncpa [#allocation7], 1
    %s959 = scalar_lea.sflag [#allocation7], 1
    %960 = vsyncpa %s959, 1
    %961 = vsyncpa [#allocation5], 1
    %s962 = scalar_lea.sflag [#allocation5], 1
    %963 = vsyncpa %s962, 1

</llo_original>
